<compile_context>
chip_gen: v5e
topology: v5e:2x2
jax: 0.10.0
libtpu: 0.0.40
codegen_flags: <defaults>
</compile_context>

<pallas_src>
import functools

import jax
import jax.numpy as jnp
from jax.experimental import pallas as pl
from jax.experimental.pallas import tpu as pltpu


GAMMA = 2.0   # fixed at 2 -> squared explicitly in the kernel
W0 = 1.0
W1 = 15.0


def bce_focal_loss_kernel(x_ref, t_ref, o_ref, *, block_rows, num_tiles,
                          valid_rows_last):
    # x_ref: (TB, C) logits tile, t_ref: (TB, 1) targets tile,
    # o_ref: (8, 128) per-tile partial-sum block (lane-dense, unmasked store).
    i = pl.program_id(0)

    x = x_ref[...].astype(jnp.float32)            # (TB, C)
    t = t_ref[...].astype(jnp.float32)            # (TB, 1)

    # Numerically-stable log-softmax over the class (lane) axis.
    x_max = jnp.max(x, axis=-1, keepdims=True)
    z = x - x_max
    e = jnp.exp(z)
    s = jnp.sum(e, axis=-1, keepdims=True)        # (TB, 1)
    log_pt = z - jnp.log(s)                       # exact log(softmax(x))
    pt = e * pl.reciprocal(s, approx=True)        # narrow-column EUP recip

    one_m_pt = 1.0 - pt
    log_1m_pt = jnp.log1p(-pt)                    # better than log(1-pt) near pt->1

    # gamma == 2 -> explicit squares on the VPU, not lax.pow on the EUP.
    loss = (-(one_m_pt * one_m_pt) * t * W1 * log_pt
            - (pt * pt) * (1.0 - t) * W0 * log_1m_pt)

    def partial_block(value):
        # Scatter the tile's scalar partial sum into element [0, 0] of an
        # (8, 128)-aligned block (pure VPU select; full unmasked vst).
        r = jax.lax.broadcasted_iota(jnp.int32, (8, 128), 0)
        c = jax.lax.broadcasted_iota(jnp.int32, (8, 128), 1)
        return jnp.where((r == 0) & (c == 0), value, 0.0)

    if valid_rows_last == block_rows:
        # block_rows divides B: no ragged-row masking anywhere.
        o_ref[...] = partial_block(jnp.sum(loss))
    else:
        last = num_tiles - 1

        @pl.when(i != last)
        def _full_tile():
            o_ref[...] = partial_block(jnp.sum(loss))

        @pl.when(i == last)
        def _ragged_tile():
            # OOB rows of the last tile hold garbage (possibly NaN/inf); the
            # select picks the literal 0.0 so nothing propagates.
            row = jax.lax.broadcasted_iota(jnp.int32, loss.shape, 0)
            masked = jnp.where(row < valid_rows_last, loss, 0.0)
            o_ref[...] = partial_block(jnp.sum(masked))


def bce_focal_loss(_input, target, *, block_rows=None):
    """_input: (B, C) float logits; target: (B,) float {0,1}. Returns scalar f32."""
    B, C = _input.shape
    lane_c = ((C + 127) // 128) * 128             # lane-padded class width

    # C-aware tile sizing: ~2 MiB of lane-padded f32 per tile, multiple of 8.
    if block_rows is None:
        target_bytes = 2 * 1024 * 1024
        block_rows = max(8, target_bytes // (4 * lane_c))
    block_rows = max(8, (int(block_rows) // 8) * 8)
    block_rows = min(block_rows, ((B + 7) // 8) * 8)

    num_tiles = -(-B // block_rows)               # Python int
    valid_rows_last = B - (num_tiles - 1) * block_rows

    # Keep logits in the producer dtype in HBM (bf16 stays bf16); kernel
    # upcasts per tile. Target is tiny -> one cheap cast/reshape (unsqueeze(-1)).
    x = _input
    t2d = target.reshape(B, 1).astype(jnp.float32)

    # Explicit VMEM budget (lane-padded): double-buffered inputs + live f32
    # temps + output blocks.  Covers v5e's 16 MiB scoped default; capped well
    # under v7x's 64 MiB physical VMEM.
    x_bytes = jnp.dtype(x.dtype).itemsize
    est_vmem = (2 * block_rows * lane_c * x_bytes     # x, double-buffered
                + 2 * block_rows * 128 * 4            # t, double-buffered (lane padded)
                + 8 * block_rows * lane_c * 4         # live f32 temps
                + 4 * 8 * 128 * 4)                    # output blocks
    vmem_limit = int(min(48 * 2**20, max(32 * 2**20, int(est_vmem * 1.25))))

    kernel = functools.partial(
        bce_focal_loss_kernel,
        block_rows=block_rows,
        num_tiles=num_tiles,
        valid_rows_last=valid_rows_last,
    )

    partials = pl.pallas_call(
        kernel,
        out_shape=jax.ShapeDtypeStruct((num_tiles * 8, 128), jnp.float32),
        grid=(num_tiles,),
        in_specs=[
            pl.BlockSpec((block_rows, C), lambda i: (i, 0)),
            pl.BlockSpec((block_rows, 1), lambda i: (i, 0)),
        ],
        out_specs=pl.BlockSpec((8, 128), lambda i: (i, 0)),
        compiler_params=pltpu.CompilerParams(
            dimension_semantics=("parallel",),    # tiles are independent -> megacore
            vmem_limit_bytes=vmem_limit,
        ),
    )(x, t2d)

    # reduction='elementwise_mean': tiny final reduce + scale in the wrapper.
    return jnp.sum(partials) * jnp.float32(1.0 / (B * C))


def _reference(x, target):
    # Pure-JAX reference mirroring the PyTorch module exactly.
    pt = jax.nn.softmax(x, axis=-1)
    t = target[:, None]
    loss = (-((1.0 - pt) ** GAMMA) * t * W1 * jnp.log(pt)
            - (pt ** GAMMA) * (1.0 - t) * W0 * jnp.log(1.0 - pt))
    return jnp.mean(loss)


if __name__ == "__main__":
    key = jax.random.PRNGKey(0)
    k1, k2, k3, k4 = jax.random.split(key, 4)

    # Small shapes consistent with the module forward: (batch, classes) + (batch,)
    B, C = 8, 16
    x = jax.random.normal(k1, (B, C), dtype=jnp.float32)
    target = jax.random.bernoulli(k2, p=0.5, shape=(B,)).astype(jnp.float32)

    loss = bce_focal_loss(x, target)
    jax.block_until_ready(loss)
    ref = _reference(x, target)
    # Tolerance slightly loosened for the approx EUP reciprocal in pt.
    assert jnp.allclose(loss, ref, rtol=2e-3, atol=2e-3), (loss, ref)

    # Ragged batch (B not a multiple of the tile): exercises the non-divisible
    # grid (no host pad) + last-tile pl.when mask + multi-tile partial sums.
    B2, C2 = 20, 16
    x2 = jax.random.normal(k3, (B2, C2), dtype=jnp.float32)
    target2 = jax.random.bernoulli(k4, p=0.5, shape=(B2,)).astype(jnp.float32)
    loss2 = bce_focal_loss(x2, target2, block_rows=8)   # 3 tiles, last one ragged
    jax.block_until_ready(loss2)
    ref2 = _reference(x2, target2)
    assert jnp.allclose(loss2, ref2, rtol=2e-3, atol=2e-3), (loss2, ref2)

    print("KERNEL_OK")
</pallas_src>

<mosaic_0001>
module attributes {stable_mosaic.version = 11 : i64} {
  func.func @bce_focal_loss_kernel(%arg0: i32, %arg1: memref<8x16xf32, #tpu.memory_space<vmem>>, %arg2: memref<8x1xf32, #tpu.memory_space<vmem>>, %arg3: memref<8x128xf32, #tpu.memory_space<vmem>>) attributes {dimension_semantics = [#tpu.dimension_semantics<parallel>], iteration_bounds = array<i64: 1>, scalar_prefetch = 0 : i64, scratch_operands = 0 : i64, tpu.core_type = #tpu.core_type<tc>, window_params = [{transform_indices = @transform_0, window_bounds = array<i64: 8, 16>}, {transform_indices = @transform_1, window_bounds = array<i64: 8, 1>}, {transform_indices = @transform_2, window_bounds = array<i64: 8, 128>}]} {
    %c0 = arith.constant 0 : index
    %c0_0 = arith.constant 0 : index
    %0 = vector.load %arg1[%c0, %c0_0] : memref<8x16xf32, #tpu.memory_space<vmem>>, vector<8x16xf32>
    %c0_1 = arith.constant 0 : index
    %c0_2 = arith.constant 0 : index
    %1 = vector.load %arg2[%c0_1, %c0_2] : memref<8x1xf32, #tpu.memory_space<vmem>>, vector<8x1xf32>
    %cst = arith.constant dense<0xFF800000> : vector<8xf32>
    %2 = vector.multi_reduction <maximumf>, %0, %cst [1] : vector<8x16xf32> to vector<8xf32>
    %3 = vector.shape_cast %2 : vector<8xf32> to vector<8x1xf32>
    %4 = vector.broadcast %3 : vector<8x1xf32> to vector<8x16xf32>
    %5 = arith.subf %0, %4 : vector<8x16xf32>
    %6 = math.exp %5 : vector<8x16xf32>
    %cst_3 = arith.constant dense<0.000000e+00> : vector<8xf32>
    %7 = vector.multi_reduction <add>, %6, %cst_3 [1] : vector<8x16xf32> to vector<8xf32>
    %8 = vector.shape_cast %7 : vector<8xf32> to vector<8x1xf32>
    %9 = math.log %8 : vector<8x1xf32>
    %10 = vector.broadcast %9 : vector<8x1xf32> to vector<8x16xf32>
    %11 = arith.subf %5, %10 : vector<8x16xf32>
    %12 = tpu.reciprocal %8 {approx = true} : vector<8x1xf32> -> vector<8x1xf32>
    %13 = vector.broadcast %12 : vector<8x1xf32> to vector<8x16xf32>
    %14 = arith.mulf %6, %13 : vector<8x16xf32>
    %cst_4 = arith.constant 1.000000e+00 : f32
    %15 = vector.broadcast %cst_4 : f32 to vector<8x16xf32>
    %16 = arith.subf %15, %14 : vector<8x16xf32>
    %cst_5 = arith.constant 0.000000e+00 : f32
    %17 = vector.broadcast %cst_5 : f32 to vector<8x16xf32>
    %18 = arith.subf %17, %14 : vector<8x16xf32>
    %19 = math.log1p %18 : vector<8x16xf32>
    %20 = arith.mulf %16, %16 : vector<8x16xf32>
    %cst_6 = arith.constant 0.000000e+00 : f32
    %21 = vector.broadcast %cst_6 : f32 to vector<8x16xf32>
    %22 = arith.subf %21, %20 : vector<8x16xf32>
    %23 = vector.broadcast %1 : vector<8x1xf32> to vector<8x16xf32>
    %24 = arith.mulf %22, %23 : vector<8x16xf32>
    %cst_7 = arith.constant 1.500000e+01 : f32
    %25 = vector.broadcast %cst_7 : f32 to vector<8x16xf32>
    %26 = arith.mulf %24, %25 : vector<8x16xf32>
    %27 = arith.mulf %26, %11 : vector<8x16xf32>
    %28 = arith.mulf %14, %14 : vector<8x16xf32>
    %cst_8 = arith.constant 1.000000e+00 : f32
    %29 = vector.broadcast %cst_8 : f32 to vector<8x1xf32>
    %30 = arith.subf %29, %1 : vector<8x1xf32>
    %31 = vector.broadcast %30 : vector<8x1xf32> to vector<8x16xf32>
    %32 = arith.mulf %28, %31 : vector<8x16xf32>
    %cst_9 = arith.constant 1.000000e+00 : f32
    %33 = vector.broadcast %cst_9 : f32 to vector<8x16xf32>
    %34 = arith.mulf %32, %33 : vector<8x16xf32>
    %35 = arith.mulf %34, %19 : vector<8x16xf32>
    %36 = arith.subf %27, %35 : vector<8x16xf32>
    %37 = vector.shape_cast %36 : vector<8x16xf32> to vector<1x8x16xf32>
    %cst_10 = arith.constant dense<0.000000e+00> : vector<1xf32>
    %38 = vector.multi_reduction <add>, %37, %cst_10 [1, 2] : vector<1x8x16xf32> to vector<1xf32>
    %39 = vector.shape_cast %38 : vector<1xf32> to vector<1x1x1xf32>
    %40 = vector.extract %39[0, 0, 0] : f32 from vector<1x1x1xf32>
    %41 = tpu.iota {dimensions = array<i32: 0>} : vector<8x128xi32>
    %42 = tpu.iota {dimensions = array<i32: 1>} : vector<8x128xi32>
    %c0_i32 = arith.constant 0 : i32
    %43 = vector.broadcast %c0_i32 : i32 to vector<8x128xi32>
    %44 = arith.cmpi eq, %41, %43 : vector<8x128xi32>
    %c0_i32_11 = arith.constant 0 : i32
    %45 = vector.broadcast %c0_i32_11 : i32 to vector<8x128xi32>
    %46 = arith.cmpi eq, %42, %45 : vector<8x128xi32>
    %47 = arith.andi %44, %46 : vector<8x128xi1>
    %cst_12 = arith.constant 0.000000e+00 : f32
    %48 = vector.broadcast %40 : f32 to vector<8x128xf32>
    %49 = vector.broadcast %cst_12 : f32 to vector<8x128xf32>
    %50 = arith.select %47, %48, %49 : vector<8x128xi1>, vector<8x128xf32>
    %c0_13 = arith.constant 0 : index
    %c0_14 = arith.constant 0 : index
    %51 = vector.load %arg3[%c0_13, %c0_14] : memref<8x128xf32, #tpu.memory_space<vmem>>, vector<8x128xf32>
    tpu.vector_store %arg3[%c0_13, %c0_14], %50 {strides = array<i32>} : memref<8x128xf32, #tpu.memory_space<vmem>>, vector<8x128xf32>,
    return
  }
  func.func @transform_0(%arg0: i32) -> (i32, i32) {
    %c0_i32 = arith.constant 0 : i32
    %c0_i32_0 = arith.constant 0 : i32
    return %arg0, %c0_i32 : i32, i32
  }
  func.func @transform_1(%arg0: i32) -> (i32, i32) {
    %c0_i32 = arith.constant 0 : i32
    %c0_i32_0 = arith.constant 0 : i32
    return %arg0, %c0_i32 : i32, i32
  }
  func.func @transform_2(%arg0: i32) -> (i32, i32) {
    %c0_i32 = arith.constant 0 : i32
    %c0_i32_0 = arith.constant 0 : i32
    return %arg0, %c0_i32 : i32, i32
  }
}

</mosaic_0001>

<llo_original>
// kernel: tpu_custom_call.1
$region0: #{tpu_custom_call.1}
  #allocation0 [shape = 'u32[]', space=smem, size = 0x4, offset = 0x4, fixed_abs, tag = 'smem constant byte address 0x4 - core index']
  #allocation1 [shape = 'u32[72,128]{1,0:T(1,128)}', space=vmem, size = 0x9000, scoped, tag = 'internal scratch']
  %s0 = inlined_call_operand.vmem [shape: f32[8,16], index: 0, kind: input, shape index: {}]
  %s1 = inlined_call_operand.vmem [shape: f32[8,1], index: 1, kind: input, shape index: {}]
  %s2 = inlined_call_operand.hbm [shape: f32[8,128], index: 2, kind: output, shape index: {}]
  %s3 = sld [smem:[#allocation0]]
  $region18: #{tpu_custom_call.1} parent=0
    _
  %s5 = ssub.s32 1, %s3
  %s6 = scalar_select 0, %s5, %s3
  $region1: #{tpu_custom_call.1} parent=0
    #allocation2 [shape = 'u8[4096]{0}', space=vmem, size = 0x1000, scoped, tag = 'output window, operand 0, single buffered']
    #allocation3 [shape = 's32[1]{0}', space=sflag, size = 0x4, scoped, tag = 'scoped memory for tpu_custom_call.1']
    %7 = vsyncpa [#allocation3], 0
    // Predicated region
    $region2: #{tpu_custom_call.1} parent=1 // pred_check
      _
    $region3: #{tpu_custom_call.1} parent=1 // pred_check_branch
      %9 = sbr.rel (0) target = $region5
    $region4: #{tpu_custom_call.1} parent=1 // pred_region
      _
    $region5: #{tpu_custom_call.1} parent=1 // pred_fallthru
      _
    // Predicated region
    $region6: #{tpu_custom_call.1} parent=1 // pred_check
      _
    $region7: #{tpu_custom_call.1} parent=1 // pred_check_branch
      %11 = sbr.rel (0) target = $region9
    $region8: #{tpu_custom_call.1} parent=1 // pred_region
      _
    $region9: #{tpu_custom_call.1} parent=1 // pred_fallthru
      _
    %v12 = vld [vmem:[%s0] sm:$0xff]
    %v13 = vld [vmem:[%s1] sm:$0xff]
    %vm14 = vcmask 130048
    %v15 = vsel %vm14, %v12, -inf
    %16 = vmax.xlane.f32.xlu0 %v15
    %v17 = vpop.xlane.xlu0 %16
    %v18 = vsub.f32 %v12, %v17
    %v19 = vmul.f32 %v18, 1.442695
    %v20 = vpow.pop %v19
    %v21 = vsel %vm14, %v20, 0.0
    %22 = vadd.xlane.f32.xlu0 %v21
    %v23 = vpop.xlane.xlu0 %22
    %v24 = vlog2.pop %v23
    %v25 = vmul.f32 %v24, 0.6931472
    %v26 = vsub.f32 %v18, %v25
    %v27 = vrcp.pop %v23
    %v28 = vmul.f32 %v20, %v27
    %v29 = vsub.f32 1.0, %v28
    %v30 = vsub.f32 0.0, %v28
    %v31 = vadd.f32 %v30, 1.0
    %v32 = vlog2.pop %v31
    %v33 = vmul.f32 %v32, 0.6931472
    %v34 = vmul.f32 -0.5, %v30
    %v35 = vadd.f32 %v34, 1.0
    %v36 = vmul.f32 %v35, %v30
    %v37 = vand.u32 2147483647, %v30
    %vm38 = vcmp.lt.f32.partialorder %v37, 0.0004427343
    %v39 = vsel %vm38, %v36, %v33
    %v40 = vmul.f32 %v29, %v29
    %v41 = vsub.f32 0.0, %v40
    %43 = vset.pattern.permute.xlu0 0
    %44 = vperm.xlu0 %43, %v13
    %v45 = vpop.permute.xlu0 %44
    %v47 = vmul.f32 %v41, %v45
    %v48 = vmul.f32 %v47, 15.0
    %v49 = vmul.f32 %v48, %v26
    %v50 = vmul.f32 %v28, %v28
    %v51 = vsub.f32 1.0, %v13
    %53 = vset.pattern.permute.xlu0 0
    %54 = vperm.xlu0 %53, %v51
    %v55 = vpop.permute.xlu0 %54
    %v57 = vmul.f32 %v50, %v55
    %v58 = vmul.f32 %v57, %v39
    %v59 = vsub.f32 %v49, %v58
    %v60 = vsel %vm14, %v59, 0.0
    %61 = vadd.xlane.f32.xlu0 %v60
    %v62 = vpop.xlane.xlu0 %61
    %v63 = vrot.slane %v62, 4
    %v64 = vadd.f32 %v62, %v63
    %v65 = vrot.slane %v64, 2
    %v66 = vadd.f32 %v64, %v65
    %v67 = vrot.slane %v66, 1
    %v68 = vadd.f32 %v66, %v67
    %s69 = vtos %v68
    %v70 = vlaneseq
    %v71 = vshrl.u32 %v70, 7
    %v72 = vlaneseq
    %v73 = vand.u32 %v72, 127
    %vm74 = vcmp.eq.s32.totalorder %v71, 0
    %vm75 = vcmp.eq.s32.totalorder %v73, 0
    %vm76 = vmand %vm74, %vm75
    %v77 = vstv %s69
    %v78 = vsel %vm76, %v77, 0.0
    %79 = vst [vmem:[#allocation2] sm:$0xff] %v78
    // Predicated region
    $region10: #{tpu_custom_call.1} parent=1 // pred_check
      _
    $region11: #{tpu_custom_call.1} parent=1 // pred_check_branch
      %81 = sbr.rel (0) target = $region13
    $region12: #{tpu_custom_call.1} parent=1 // pred_region
      %83 = vsyncadd [#allocation3], 0
      %s85 = sshll.u32 [#allocation2], 4
      %s86 = int_to_ptr.vmem [resolvable:$true] %s85
      %s87 = sshll.u32 %s2, 4
      %s88 = int_to_ptr.hbm [resolvable:$true] %s87
      %90 = dma.vmem_to_hbm [thread:$0]  %s86, 128, %s88, [#allocation3]
    $region13: #{tpu_custom_call.1} parent=1 // pred_fallthru
      _
    // Predicated region
    $region14: #{tpu_custom_call.1} parent=1 // pred_check
      _
    $region15: #{tpu_custom_call.1} parent=1 // pred_check_branch
      %92 = sbr.rel (0) target = $region17
    $region16: #{tpu_custom_call.1} parent=1 // pred_region
      %94 = dma.done [#allocation3], 128
    $region17: #{tpu_custom_call.1} parent=1 // pred_fallthru
      _
    %95 = vsyncpa [#allocation3], 1

</llo_original>
